<compile_context>
chip_gen: v7x
topology: tpu7x:2x2x1
jax: 0.10.0
libtpu: 0.0.40
codegen_flags: <defaults>
</compile_context>

<pallas_src>
import functools

import jax
import jax.numpy as jnp
import numpy as np
from jax import lax
from jax.experimental import pallas as pl
from jax.experimental.pallas import tpu as pltpu

LANE = 128
SUB = 8


def _num_tensorcores() -> int:
    """2 on v7x-class chips (2 TensorCores / chip), else 1."""
    try:
        kind = jax.devices()[0].device_kind.lower().replace(" ", "")
    except Exception:
        return 1
    return 2 if ("v7" in kind or "tpu7" in kind) else 1


def _exloss_kernel(x_ref, t_ref,
                   pos_sum_ref, neg_sum_ref, pos_cnt_ref,
                   acc_pos, acc_neg, acc_cnt,
                   *, n_outer, n_inner, tile_rows, tail_valid):
    """Accumulate one-vreg (8,128) partial sums; reduce once per outer chunk.

    x_ref, t_ref : (tile_rows, 128) VMEM tiles (input, target), native dtype
    *_sum/cnt_ref: (1, 1) f32 SMEM scalar outputs per outer chunk
    acc_*        : (8, 128) f32 VMEM vector accumulators
    """
    o = pl.program_id(0)          # outer (parallel) chunk
    i = pl.program_id(1)          # inner (reduction) step

    @pl.when(i == 0)
    def _init():
        acc_pos[...] = jnp.zeros_like(acc_pos)
        acc_neg[...] = jnp.zeros_like(acc_neg)
        acc_cnt[...] = jnp.zeros_like(acc_cnt)

    x = x_ref[...].astype(jnp.float32)
    t = t_ref[...].astype(jnp.float32)

    def reduce_rows(v):           # (tile_rows,128) -> (8,128), pure vreg adds
        return v.reshape(tile_rows // SUB, SUB, LANE).sum(axis=0)

    def accumulate(valid):
        p = t > 0.001
        if valid is None:                         # fast path: all elements real
            pos = p
            neg = jnp.logical_not(p)
        else:                                     # tail path: mask pad / OOB rows
            pos = jnp.logical_and(p, valid)
            neg = jnp.logical_and(jnp.logical_not(p), valid)

        # em = exp(-|x|); softplus(-x) = max(-x,0) + log(1+em)
        a = jnp.abs(x)
        em = jnp.exp(-a)
        one_p_em = 1.0 + em
        l1p = jnp.log(one_p_em)

        # -t * log(sigmoid(x))
        pos_loss = t * (jnp.maximum(-x, 0.0) + l1p)

        # -log(1 - sigmoid(x) + 1e-8):
        #   1 - sigmoid(x) = numer / (1+em), numer = em if x>=0 else 1
        #   => l1p - log(numer + eps*(1+em))
        eps = 1e-8
        numer = jnp.where(x >= 0.0, em, 1.0)
        neg_loss = l1p - jnp.log(numer + eps * one_p_em)

        acc_pos[...] += reduce_rows(jnp.where(pos, pos_loss, 0.0))
        acc_neg[...] += reduce_rows(jnp.where(neg, neg_loss, 0.0))
        acc_cnt[...] += reduce_rows(pos.astype(jnp.float32))

    block_elems = tile_rows * LANE
    n_blocks = n_outer * n_inner
    if tail_valid == block_elems:
        # No lane padding and no partial tail block: mask-free everywhere.
        accumulate(None)
    else:
        def tail_mask():
            row_ids = lax.broadcasted_iota(jnp.int32, (tile_rows, LANE), 0)
            lane_ids = lax.broadcasted_iota(jnp.int32, (tile_rows, LANE), 1)
            return (row_ids * LANE + lane_ids) < tail_valid

        if n_blocks == 1:
            accumulate(tail_mask())
        else:
            is_tail = jnp.logical_and(o == n_outer - 1, i == n_inner - 1)

            @pl.when(jnp.logical_not(is_tail))
            def _fast():
                accumulate(None)

            @pl.when(is_tail)
            def _masked():
                accumulate(tail_mask())

    @pl.when(i == n_inner - 1)
    def _finalize():
        pos_sum_ref[0, 0] = jnp.sum(acc_pos[...])
        neg_sum_ref[0, 0] = jnp.sum(acc_neg[...])
        pos_cnt_ref[0, 0] = jnp.sum(acc_cnt[...])


@functools.partial(jax.jit, static_argnames=("row_tile",))
def ex_loss(inp, tgt, *, row_tile=4096):
    """Pallas implementation of ExLoss.forward(input, target) -> scalar f32."""
    assert inp.shape == tgt.shape
    n = int(np.prod(inp.shape))
    assert n > 0

    # Sublane multiple required by the BlockSpec for the narrowest input dtype
    # (8 for 32-bit, 16 for bf16, 32 for 8-bit).
    itemsize = min(jnp.dtype(inp.dtype).itemsize, jnp.dtype(tgt.dtype).itemsize)
    row_mult = max(SUB, (SUB * 4) // max(1, itemsize))

    rows = -(-n // LANE)                       # ceil-div to the lane boundary
    rows = max(rows, row_mult)                 # tiny inputs: at least one tile
    pad = rows * LANE - n

    def to_slab(arr):
        arr = arr.reshape(-1)                  # keep native dtype; no upcast copy
        if pad:
            arr = jnp.pad(arr, (0, pad))       # only when n % 128 != 0 (or tiny)
        return arr.reshape(rows, LANE)

    x = to_slab(inp)
    t = to_slab(tgt)

    # Row tile: multiple of row_mult, no larger than the slab.
    row_tile_r = max(row_mult, (row_tile // row_mult) * row_mult)
    tile_rows = min(row_tile_r, (rows // row_mult) * row_mult)
    n_blocks = -(-rows // tile_rows)
    block_elems = tile_rows * LANE
    # Number of real (unpadded, in-bounds) elements inside the last block.
    tail_valid = n - (n_blocks - 1) * block_elems

    # Outer "parallel" split: exactly 2 on 2-TensorCore chips when it divides,
    # else 1 (1-TC chips: any split is pure overhead).
    if _num_tensorcores() >= 2 and n_blocks >= 2 and n_blocks % 2 == 0:
        n_outer = 2
    else:
        n_outer = 1
    n_inner = n_blocks // n_outer

    kernel = functools.partial(
        _exloss_kernel, n_outer=n_outer, n_inner=n_inner,
        tile_rows=tile_rows, tail_valid=tail_valid)

    tile_spec = pl.BlockSpec((tile_rows, LANE),
                             lambda o, i: (o * n_inner + i, 0))
    out_scalar_spec = pl.BlockSpec((1, 1), lambda o, i: (o, 0),
                                   memory_space=pltpu.SMEM)
    out_sds = jax.ShapeDtypeStruct((n_outer, 1), jnp.float32)

    # Explicit VMEM budget: 2 inputs x 2 buffers x tile + scratch + headroom,
    # clamped to [16 MiB, 32 MiB] (safe on v5e / v6e / v7x).
    tile_bytes = tile_rows * LANE * (
        jnp.dtype(inp.dtype).itemsize + jnp.dtype(tgt.dtype).itemsize)
    vmem_need = 2 * tile_bytes + 3 * SUB * LANE * 4 + (4 << 20)
    vmem_limit = int(min(max(vmem_need, 16 << 20), 32 << 20))

    pos_sum, neg_sum, pos_cnt = pl.pallas_call(
        kernel,
        out_shape=(out_sds, out_sds, out_sds),
        grid_spec=pltpu.PrefetchScalarGridSpec(
            num_scalar_prefetch=0,
            grid=(n_outer, n_inner),
            in_specs=[tile_spec, tile_spec],
            out_specs=[out_scalar_spec, out_scalar_spec, out_scalar_spec],
            scratch_shapes=[
                pltpu.VMEM((SUB, LANE), jnp.float32),
                pltpu.VMEM((SUB, LANE), jnp.float32),
                pltpu.VMEM((SUB, LANE), jnp.float32),
            ],
        ),
        compiler_params=pltpu.CompilerParams(
            dimension_semantics=("parallel", "arbitrary"),
            vmem_limit_bytes=vmem_limit,
            allow_input_fusion=[True, True],
        ),
    )(x, t)

    ps = jnp.sum(pos_sum)
    ns = jnp.sum(neg_sum)
    num_pos = jnp.sum(pos_cnt)
    num_neg = jnp.float32(n) - num_pos         # pos/neg partition the n elements

    loss = jnp.where(num_pos > 0.0, ps / jnp.maximum(num_pos, 1.0), 0.0)
    loss = loss + jnp.where(num_neg > 0.0, ns / jnp.maximum(num_neg, 1.0), 0.0)
    return loss


def ex_loss_ref(inp, tgt):
    """Pure-JAX reference with identical semantics to the PyTorch module."""
    x = inp.reshape(-1).astype(jnp.float32)
    t = tgt.reshape(-1).astype(jnp.float32)
    s = jax.nn.sigmoid(x)
    pos = t > 0.001
    neg = jnp.logical_not(pos)
    pos_loss = jnp.where(pos, -t * jnp.log(s), 0.0)
    neg_loss = jnp.where(neg, -jnp.log(1.0 - s + 1e-8), 0.0)
    num_pos = jnp.sum(pos.astype(jnp.float32))
    num_neg = jnp.sum(neg.astype(jnp.float32))
    loss = jnp.where(num_pos > 0, jnp.sum(pos_loss) / num_pos, 0.0)
    loss = loss + jnp.where(num_neg > 0, jnp.sum(neg_loss) / num_neg, 0.0)
    return loss


def _run_case(shape, seed=0, **kwargs):
    key = jax.random.PRNGKey(seed)
    k_in, k_tg = jax.random.split(key)
    inp = jax.random.normal(k_in, shape, dtype=jnp.float32)
    raw = jax.random.uniform(k_tg, shape, dtype=jnp.float32)
    tgt = jnp.where(raw > 0.8, raw, jnp.zeros_like(raw))  # sparse positives

    loss = jax.block_until_ready(ex_loss(inp, tgt, **kwargs))
    ref = jax.block_until_ready(ex_loss_ref(inp, tgt))
    np.testing.assert_allclose(np.array(loss), np.array(ref),
                               rtol=5e-5, atol=1e-5)


if __name__ == "__main__":
    # Small NCHW shapes consistent with a heatmap / attention-map head output.
    _run_case((2, 4, 16, 16))                  # lane-aligned, single block, fast path only
    _run_case((2, 4, 10, 12))                  # lane padding -> masked single tail block
    _run_case((2, 4, 16, 17), row_tile=8)      # multi-block, partial (OOB) tail block
    _run_case((2, 4, 33, 45), row_tile=16)     # multi-block + lane padding in the tail
    _run_case((2, 8, 64, 64))                  # larger single block with default tile

    print("KERNEL_OK")
</pallas_src>

<mosaic_0001>
module attributes {stable_mosaic.version = 11 : i64} {
  func.func @_exloss_kernel(%arg0: i32, %arg1: i32, %arg2: memref<16x128xf32, #tpu.memory_space<vmem>>, %arg3: memref<16x128xf32, #tpu.memory_space<vmem>>, %arg4: memref<1x1xf32, #tpu.memory_space<smem>>, %arg5: memref<1x1xf32, #tpu.memory_space<smem>>, %arg6: memref<1x1xf32, #tpu.memory_space<smem>>, %arg7: memref<8x128xf32, #tpu.memory_space<vmem>>, %arg8: memref<8x128xf32, #tpu.memory_space<vmem>>, %arg9: memref<8x128xf32, #tpu.memory_space<vmem>>) attributes {dimension_semantics = [#tpu.dimension_semantics<parallel>, #tpu.dimension_semantics<arbitrary>], iteration_bounds = array<i64: 1, 1>, scalar_prefetch = 0 : i64, scratch_operands = 3 : i64, tpu.core_type = #tpu.core_type<tc>, window_params = [{transform_indices = @transform_0, window_bounds = array<i64: 16, 128>}, {transform_indices = @transform_1, window_bounds = array<i64: 16, 128>}, {transform_indices = @transform_2, window_bounds = array<i64: 1, 1>}, {transform_indices = @transform_3, window_bounds = array<i64: 1, 1>}, {transform_indices = @transform_4, window_bounds = array<i64: 1, 1>}]} {
    %c0_i32 = arith.constant 0 : i32
    %0 = arith.cmpi eq, %arg1, %c0_i32 : i32
    %1 = arith.extui %0 : i1 to i32
    %c0_i32_0 = arith.constant 0 : i32
    %2 = arith.cmpi ne, %1, %c0_i32_0 : i32
    scf.if %2 {
      %cst_31 = arith.constant 0.000000e+00 : f32
      %54 = vector.broadcast %cst_31 : f32 to vector<8x128xf32>
      %c0_32 = arith.constant 0 : index
      %c0_33 = arith.constant 0 : index
      %55 = vector.load %arg7[%c0_32, %c0_33] : memref<8x128xf32, #tpu.memory_space<vmem>>, vector<8x128xf32>
      tpu.vector_store %arg7[%c0_32, %c0_33], %54 {strides = array<i32>} : memref<8x128xf32, #tpu.memory_space<vmem>>, vector<8x128xf32>,
      %cst_34 = arith.constant 0.000000e+00 : f32
      %56 = vector.broadcast %cst_34 : f32 to vector<8x128xf32>
      %c0_35 = arith.constant 0 : index
      %c0_36 = arith.constant 0 : index
      %57 = vector.load %arg8[%c0_35, %c0_36] : memref<8x128xf32, #tpu.memory_space<vmem>>, vector<8x128xf32>
      tpu.vector_store %arg8[%c0_35, %c0_36], %56 {strides = array<i32>} : memref<8x128xf32, #tpu.memory_space<vmem>>, vector<8x128xf32>,
      %cst_37 = arith.constant 0.000000e+00 : f32
      %58 = vector.broadcast %cst_37 : f32 to vector<8x128xf32>
      %c0_38 = arith.constant 0 : index
      %c0_39 = arith.constant 0 : index
      %59 = vector.load %arg9[%c0_38, %c0_39] : memref<8x128xf32, #tpu.memory_space<vmem>>, vector<8x128xf32>
      tpu.vector_store %arg9[%c0_38, %c0_39], %58 {strides = array<i32>} : memref<8x128xf32, #tpu.memory_space<vmem>>, vector<8x128xf32>,
    } else {
    }
    %c0 = arith.constant 0 : index
    %c0_1 = arith.constant 0 : index
    %3 = vector.load %arg2[%c0, %c0_1] : memref<16x128xf32, #tpu.memory_space<vmem>>, vector<16x128xf32>
    %c0_2 = arith.constant 0 : index
    %c0_3 = arith.constant 0 : index
    %4 = vector.load %arg3[%c0_2, %c0_3] : memref<16x128xf32, #tpu.memory_space<vmem>>, vector<16x128xf32>
    %cst = arith.constant 1.000000e-03 : f32
    %5 = vector.broadcast %cst : f32 to vector<16x128xf32>
    %6 = arith.cmpf ogt, %4, %5 : vector<16x128xf32>
    %cst_4 = arith.constant dense<true> : vector<16x128xi1>
    %7 = arith.xori %6, %cst_4 : vector<16x128xi1>
    %8 = math.absf %3 : vector<16x128xf32>
    %cst_5 = arith.constant 0.000000e+00 : f32
    %9 = vector.broadcast %cst_5 : f32 to vector<16x128xf32>
    %10 = arith.subf %9, %8 : vector<16x128xf32>
    %11 = math.exp %10 : vector<16x128xf32>
    %cst_6 = arith.constant 1.000000e+00 : f32
    %12 = vector.broadcast %cst_6 : f32 to vector<16x128xf32>
    %13 = arith.addf %12, %11 : vector<16x128xf32>
    %14 = math.log %13 : vector<16x128xf32>
    %cst_7 = arith.constant 0.000000e+00 : f32
    %15 = vector.broadcast %cst_7 : f32 to vector<16x128xf32>
    %16 = arith.subf %15, %3 : vector<16x128xf32>
    %cst_8 = arith.constant 0.000000e+00 : f32
    %17 = vector.broadcast %cst_8 : f32 to vector<16x128xf32>
    %18 = arith.maximumf %16, %17 : vector<16x128xf32>
    %19 = arith.addf %18, %14 : vector<16x128xf32>
    %20 = arith.mulf %4, %19 : vector<16x128xf32>
    %cst_9 = arith.constant 0.000000e+00 : f32
    %21 = vector.broadcast %cst_9 : f32 to vector<16x128xf32>
    %22 = arith.cmpf oge, %3, %21 : vector<16x128xf32>
    %cst_10 = arith.constant 1.000000e+00 : f32
    %23 = vector.broadcast %cst_10 : f32 to vector<16x128xf32>
    %24 = arith.select %22, %11, %23 : vector<16x128xi1>, vector<16x128xf32>
    %cst_11 = arith.constant 9.99999993E-9 : f32
    %25 = vector.broadcast %cst_11 : f32 to vector<16x128xf32>
    %26 = arith.mulf %25, %13 : vector<16x128xf32>
    %27 = arith.addf %24, %26 : vector<16x128xf32>
    %28 = math.log %27 : vector<16x128xf32>
    %29 = arith.subf %14, %28 : vector<16x128xf32>
    %c0_12 = arith.constant 0 : index
    %c0_13 = arith.constant 0 : index
    %30 = vector.load %arg7[%c0_12, %c0_13] : memref<8x128xf32, #tpu.memory_space<vmem>>, vector<8x128xf32>
    %cst_14 = arith.constant 0.000000e+00 : f32
    %31 = vector.broadcast %cst_14 : f32 to vector<16x128xf32>
    %32 = arith.select %6, %20, %31 : vector<16x128xi1>, vector<16x128xf32>
    %33 = vector.shape_cast %32 : vector<16x128xf32> to vector<2x8x128xf32>
    %cst_15 = arith.constant dense<0.000000e+00> : vector<8x128xf32>
    %34 = vector.multi_reduction <add>, %33, %cst_15 [0] : vector<2x8x128xf32> to vector<8x128xf32>
    %35 = arith.addf %30, %34 : vector<8x128xf32>
    %c0_16 = arith.constant 0 : index
    %c0_17 = arith.constant 0 : index
    %36 = vector.load %arg7[%c0_16, %c0_17] : memref<8x128xf32, #tpu.memory_space<vmem>>, vector<8x128xf32>
    tpu.vector_store %arg7[%c0_16, %c0_17], %35 {strides = array<i32>} : memref<8x128xf32, #tpu.memory_space<vmem>>, vector<8x128xf32>,
    %c0_18 = arith.constant 0 : index
    %c0_19 = arith.constant 0 : index
    %37 = vector.load %arg8[%c0_18, %c0_19] : memref<8x128xf32, #tpu.memory_space<vmem>>, vector<8x128xf32>
    %cst_20 = arith.constant 0.000000e+00 : f32
    %38 = vector.broadcast %cst_20 : f32 to vector<16x128xf32>
    %39 = arith.select %7, %29, %38 : vector<16x128xi1>, vector<16x128xf32>
    %40 = vector.shape_cast %39 : vector<16x128xf32> to vector<2x8x128xf32>
    %cst_21 = arith.constant dense<0.000000e+00> : vector<8x128xf32>
    %41 = vector.multi_reduction <add>, %40, %cst_21 [0] : vector<2x8x128xf32> to vector<8x128xf32>
    %42 = arith.addf %37, %41 : vector<8x128xf32>
    %c0_22 = arith.constant 0 : index
    %c0_23 = arith.constant 0 : index
    %43 = vector.load %arg8[%c0_22, %c0_23] : memref<8x128xf32, #tpu.memory_space<vmem>>, vector<8x128xf32>
    tpu.vector_store %arg8[%c0_22, %c0_23], %42 {strides = array<i32>} : memref<8x128xf32, #tpu.memory_space<vmem>>, vector<8x128xf32>,
    %c0_24 = arith.constant 0 : index
    %c0_25 = arith.constant 0 : index
    %44 = vector.load %arg9[%c0_24, %c0_25] : memref<8x128xf32, #tpu.memory_space<vmem>>, vector<8x128xf32>
    %45 = arith.extui %6 : vector<16x128xi1> to vector<16x128xi32>
    %46 = arith.sitofp %45 : vector<16x128xi32> to vector<16x128xf32>
    %47 = vector.shape_cast %46 : vector<16x128xf32> to vector<2x8x128xf32>
    %cst_26 = arith.constant dense<0.000000e+00> : vector<8x128xf32>
    %48 = vector.multi_reduction <add>, %47, %cst_26 [0] : vector<2x8x128xf32> to vector<8x128xf32>
    %49 = arith.addf %44, %48 : vector<8x128xf32>
    %c0_27 = arith.constant 0 : index
    %c0_28 = arith.constant 0 : index
    %50 = vector.load %arg9[%c0_27, %c0_28] : memref<8x128xf32, #tpu.memory_space<vmem>>, vector<8x128xf32>
    tpu.vector_store %arg9[%c0_27, %c0_28], %49 {strides = array<i32>} : memref<8x128xf32, #tpu.memory_space<vmem>>, vector<8x128xf32>,
    %c0_i32_29 = arith.constant 0 : i32
    %51 = arith.cmpi eq, %arg1, %c0_i32_29 : i32
    %52 = arith.extui %51 : i1 to i32
    %c0_i32_30 = arith.constant 0 : i32
    %53 = arith.cmpi ne, %52, %c0_i32_30 : i32
    scf.if %53 {
      %c0_31 = arith.constant 0 : index
      %c0_32 = arith.constant 0 : index
      %54 = vector.load %arg7[%c0_31, %c0_32] : memref<8x128xf32, #tpu.memory_space<vmem>>, vector<8x128xf32>
      %55 = vector.shape_cast %54 : vector<8x128xf32> to vector<1x8x128xf32>
      %cst_33 = arith.constant dense<0.000000e+00> : vector<1xf32>
      %56 = vector.multi_reduction <add>, %55, %cst_33 [1, 2] : vector<1x8x128xf32> to vector<1xf32>
      %57 = vector.shape_cast %56 : vector<1xf32> to vector<1x1x1xf32>
      %58 = vector.extract %57[0, 0, 0] : f32 from vector<1x1x1xf32>
      %c0_34 = arith.constant 0 : index
      %c0_35 = arith.constant 0 : index
      %59 = memref.load %arg4[%c0_34, %c0_35] : memref<1x1xf32, #tpu.memory_space<smem>>
      memref.store %58, %arg4[%c0_34, %c0_35] : memref<1x1xf32, #tpu.memory_space<smem>>
      %c0_36 = arith.constant 0 : index
      %c0_37 = arith.constant 0 : index
      %60 = vector.load %arg8[%c0_36, %c0_37] : memref<8x128xf32, #tpu.memory_space<vmem>>, vector<8x128xf32>
      %61 = vector.shape_cast %60 : vector<8x128xf32> to vector<1x8x128xf32>
      %cst_38 = arith.constant dense<0.000000e+00> : vector<1xf32>
      %62 = vector.multi_reduction <add>, %61, %cst_38 [1, 2] : vector<1x8x128xf32> to vector<1xf32>
      %63 = vector.shape_cast %62 : vector<1xf32> to vector<1x1x1xf32>
      %64 = vector.extract %63[0, 0, 0] : f32 from vector<1x1x1xf32>
      %c0_39 = arith.constant 0 : index
      %c0_40 = arith.constant 0 : index
      %65 = memref.load %arg5[%c0_39, %c0_40] : memref<1x1xf32, #tpu.memory_space<smem>>
      memref.store %64, %arg5[%c0_39, %c0_40] : memref<1x1xf32, #tpu.memory_space<smem>>
      %c0_41 = arith.constant 0 : index
      %c0_42 = arith.constant 0 : index
      %66 = vector.load %arg9[%c0_41, %c0_42] : memref<8x128xf32, #tpu.memory_space<vmem>>, vector<8x128xf32>
      %67 = vector.shape_cast %66 : vector<8x128xf32> to vector<1x8x128xf32>
      %cst_43 = arith.constant dense<0.000000e+00> : vector<1xf32>
      %68 = vector.multi_reduction <add>, %67, %cst_43 [1, 2] : vector<1x8x128xf32> to vector<1xf32>
      %69 = vector.shape_cast %68 : vector<1xf32> to vector<1x1x1xf32>
      %70 = vector.extract %69[0, 0, 0] : f32 from vector<1x1x1xf32>
      %c0_44 = arith.constant 0 : index
      %c0_45 = arith.constant 0 : index
      %71 = memref.load %arg6[%c0_44, %c0_45] : memref<1x1xf32, #tpu.memory_space<smem>>
      memref.store %70, %arg6[%c0_44, %c0_45] : memref<1x1xf32, #tpu.memory_space<smem>>
    } else {
    }
    return
  }
  func.func @transform_0(%arg0: i32, %arg1: i32) -> (i32, i32) {
    %c1_i32 = arith.constant 1 : i32
    %0 = arith.muli %arg0, %c1_i32 : i32
    %1 = arith.addi %0, %arg1 : i32
    %c0_i32 = arith.constant 0 : i32
    %c0_i32_0 = arith.constant 0 : i32
    return %1, %c0_i32 : i32, i32
  }
  func.func @transform_1(%arg0: i32, %arg1: i32) -> (i32, i32) {
    %c1_i32 = arith.constant 1 : i32
    %0 = arith.muli %arg0, %c1_i32 : i32
    %1 = arith.addi %0, %arg1 : i32
    %c0_i32 = arith.constant 0 : i32
    %c0_i32_0 = arith.constant 0 : i32
    return %1, %c0_i32 : i32, i32
  }
  func.func @transform_2(%arg0: i32, %arg1: i32) -> (i32, i32) {
    %c0_i32 = arith.constant 0 : i32
    %c0_i32_0 = arith.constant 0 : i32
    return %arg0, %c0_i32 : i32, i32
  }
  func.func @transform_3(%arg0: i32, %arg1: i32) -> (i32, i32) {
    %c0_i32 = arith.constant 0 : i32
    %c0_i32_0 = arith.constant 0 : i32
    return %arg0, %c0_i32 : i32, i32
  }
  func.func @transform_4(%arg0: i32, %arg1: i32) -> (i32, i32) {
    %c0_i32 = arith.constant 0 : i32
    %c0_i32_0 = arith.constant 0 : i32
    return %arg0, %c0_i32 : i32, i32
  }
}

</mosaic_0001>

<llo_original>
// kernel: ex_loss.1
$region0: #{ex_loss.1}
  #allocation0 [shape = 'u32[]', space=smem, size = 0x4, offset = 0x4, fixed_abs, tag = 'smem constant byte address 0x4 - core index']
  #allocation1 [shape = 'u32[144,128]{1,0:T(1,128)}', space=vmem, size = 0x12000, scoped, tag = 'internal scratch']
  #allocation2 [shape = 'f32[8,128]{1,0:T(8,128)}', space=vmem, size = 0x1000, scoped, tag = 'scratch operand']
  #allocation3 [shape = 'f32[8,128]{1,0:T(8,128)}', space=vmem, size = 0x1000, scoped, tag = 'scratch operand']
  #allocation4 [shape = 'f32[8,128]{1,0:T(8,128)}', space=vmem, size = 0x1000, scoped, tag = 'scratch operand']
  %s0 = inlined_call_operand.vmem [shape: f32[16,128], index: 0, kind: input, shape index: {}]
  %s1 = inlined_call_operand.vmem [shape: f32[16,128], index: 1, kind: input, shape index: {}]
  %s2 = inlined_call_operand.hbm [shape: f32[1,1], index: 2, kind: output, shape index: {0}]
  %s3 = inlined_call_operand.hbm [shape: f32[1,1], index: 3, kind: output, shape index: {1}]
  %s4 = inlined_call_operand.hbm [shape: f32[1,1], index: 4, kind: output, shape index: {2}]
  %5 = xla_tuple %s2, %s3, %s4
  %s6 = sld [smem:[#allocation0]]
  $region42: #{ex_loss.1} parent=0
    _
  %s8 = ssub.s32 1, %s6
  %s9 = scalar_select 0, %s8, %s6
  $region1: #{ex_loss.1} parent=0
    #allocation5 [shape = 'u8[512]{0}', space=smem, size = 0x200, scoped, tag = 'output window, operand 0, single buffered']
    #allocation6 [shape = 's32[1]{0}', space=sflag, size = 0x4, scoped, tag = 'scoped memory for ex_loss.1']
    #allocation7 [shape = 'u8[512]{0}', space=smem, size = 0x200, scoped, tag = 'output window, operand 1, single buffered']
    #allocation8 [shape = 's32[1]{0}', space=sflag, size = 0x4, scoped, tag = 'scoped memory for ex_loss.1']
    #allocation9 [shape = 'u8[512]{0}', space=smem, size = 0x200, scoped, tag = 'output window, operand 2, single buffered']
    %10 = vsyncpa [#allocation6], 0
    %11 = vsyncpa [#allocation8], 0
    // Predicated region
    $region2: #{ex_loss.1} parent=1 // pred_check
      _
    $region3: #{ex_loss.1} parent=1 // pred_check_branch
      %13 = sbr.rel (0) target = $region5
    $region4: #{ex_loss.1} parent=1 // pred_region
      %s14 = sadd.s32 0, 0
      %s15 = smul.u32 2, %s14
      %p16 = scmp.lt.s32.totalorder %s15, 1
      %s17 = scalar_select %p16, %s15, 1
      %s18 = smul.addr %s17, 8
      %s19 = scalar_lea.vmem %s0, %s18
      %s20 = sadd.s32 0, 0
      %s21 = smul.u32 2, %s20
    $region5: #{ex_loss.1} parent=1 // pred_fallthru
      _
    // Predicated region
    $region6: #{ex_loss.1} parent=1 // pred_check
      _
    $region7: #{ex_loss.1} parent=1 // pred_check_branch
      %23 = sbr.rel (0) target = $region9
    $region8: #{ex_loss.1} parent=1 // pred_region
      %s24 = sadd.s32 0, 0
      %s25 = smul.u32 2, %s24
      %p26 = scmp.lt.s32.totalorder %s25, 1
      %s27 = scalar_select %p26, %s25, 1
      %s28 = smul.addr %s27, 8
      %s29 = scalar_lea.vmem %s1, %s28
      %s30 = sadd.s32 0, 0
      %s31 = smul.u32 2, %s30
    $region9: #{ex_loss.1} parent=1 // pred_fallthru
      _
    %s32 = sadd.s32 0, 0
    %s33 = smul.u32 2, %s32
    %p34 = scmp.lt.s32.totalorder %s33, 1
    %s35 = scalar_select %p34, %s33, 1
    %s36 = smul.addr %s35, 8
    %s37 = scalar_lea.vmem %s0, %s36
    %s38 = sadd.s32 0, 0
    %s39 = smul.u32 2, %s38
    %p40 = scmp.lt.s32.totalorder %s39, 1
    %s41 = scalar_select %p40, %s39, 1
    %s42 = smul.addr %s41, 8
    %s43 = scalar_lea.vmem %s1, %s42
    %s44 = sadd.s32 0, 0
    %s45 = smul.u32 2, %s44
    %p46 = scmp.lt.s32.totalorder %s45, 1
    %s47 = scalar_select %p46, %s45, 1
    %s48 = smul.addr %s47, 8
    %s49 = scalar_lea.vmem %s0, %s48
    %s50 = sadd.s32 0, 0
    %s51 = smul.u32 2, %s50
    %s52 = sadd.s32 0, 0
    %s53 = smul.u32 2, %s52
    %p54 = scmp.lt.s32.totalorder %s53, 1
    %s55 = scalar_select %p54, %s53, 1
    %s56 = smul.addr %s55, 8
    %s57 = scalar_lea.vmem %s1, %s56
    %s58 = sadd.s32 0, 0
    %s59 = smul.u32 2, %s58
    %p60 = scmp.eq.s32.totalorder 0, 0
    // Predicated region
    $region10: #{ex_loss.1} parent=1 // pred_check
      %p61 = pneg %p60
    $region11: #{ex_loss.1} parent=1 // pred_check_branch
      %63 = sbr.rel (%p61) target = $region13
    $region12: #{ex_loss.1} parent=1 // pred_region
      %64 = vst [vmem:[#allocation2] sm:$0xff] 0.0
      %65 = vst [vmem:[#allocation3] sm:$0xff] 0.0
      %66 = vst [vmem:[#allocation4] sm:$0xff] 0.0
    $region13: #{ex_loss.1} parent=1 // pred_fallthru
      _
    %v67 = vld [vmem:[%s49] sm:$0xff]
    %v68 = vld [vmem:[%s49 + $0x8] sm:$0xff]
    %v69 = vld [vmem:[%s57] sm:$0xff]
    %v70 = vld [vmem:[%s57 + $0x8] sm:$0xff]
    %vm71 = vcmp.gt.f32.partialorder %v69, 0.001
    %vm72 = vcmp.gt.f32.partialorder %v70, 0.001
    %vm73 = vmxor %vm71, 1
    %vm74 = vmxor %vm72, 1
    %v75 = vand.u32 2147483647, %v67
    %v76 = vand.u32 2147483647, %v68
    %v77 = vsub.f32 0.0, %v75
    %v78 = vsub.f32 0.0, %v76
    %v79 = vmul.f32 %v77, 1.442695
    %v80 = vpow.pop %v79
    %v81 = vmul.f32 %v78, 1.442695
    %v82 = vpow.pop %v81
    %v83 = vadd.f32 %v80, 1.0
    %v84 = vadd.f32 %v82, 1.0
    %v85 = vlog2.pop %v83
    %v86 = vmul.f32 %v85, 0.6931472
    %v87 = vlog2.pop %v84
    %v88 = vmul.f32 %v87, 0.6931472
    %v89 = vsub.f32 0.0, %v67
    %v90 = vsub.f32 0.0, %v68
    %v91 = vmax.f32 %v89, 0.0
    %v92 = vmax.f32 %v90, 0.0
    %v93 = vadd.f32 %v91, %v86
    %v94 = vadd.f32 %v92, %v88
    %v95 = vmul.f32 %v69, %v93
    %v96 = vmul.f32 %v70, %v94
    %vm97 = vcmp.ge.f32.partialorder %v67, 0.0
    %vm98 = vcmp.ge.f32.partialorder %v68, 0.0
    %v99 = vsel %vm97, %v80, 1.0
    %v100 = vsel %vm98, %v82, 1.0
    %v101 = vmul.f32 %v83, 1e-08
    %v102 = vmul.f32 %v84, 1e-08
    %v103 = vadd.f32 %v99, %v101
    %v104 = vadd.f32 %v100, %v102
    %v105 = vlog2.pop %v103
    %v106 = vmul.f32 %v105, 0.6931472
    %v107 = vlog2.pop %v104
    %v108 = vmul.f32 %v107, 0.6931472
    %v109 = vsub.f32 %v86, %v106
    %v110 = vsub.f32 %v88, %v108
    %v111 = vld [vmem:[#allocation2] sm:$0xff]
    %v112 = vsel %vm71, %v95, 0.0
    %v113 = vsel %vm72, %v96, 0.0
    %v114 = vadd.f32 %v112, %v113
    %v115 = vadd.f32 %v111, %v114
    %116 = vst [vmem:[#allocation2] sm:$0xff] %v115
    %v117 = vld [vmem:[#allocation3] sm:$0xff]
    %v118 = vsel %vm73, %v109, 0.0
    %v119 = vsel %vm74, %v110, 0.0
    %v120 = vadd.f32 %v118, %v119
    %v121 = vadd.f32 %v117, %v120
    %122 = vst [vmem:[#allocation3] sm:$0xff] %v121
    %v123 = vld [vmem:[#allocation4] sm:$0xff]
    %v124 = vsel %vm71, 1, 0
    %v125 = vsel %vm72, 1, 0
    %v126 = vcvt.s32.f32 %v124
    %v127 = vcvt.s32.f32 %v125
    %v128 = vadd.f32 %v126, %v127
    %v129 = vadd.f32 %v123, %v128
    %130 = vst [vmem:[#allocation4] sm:$0xff] %v129
    // Predicated region
    $region14: #{ex_loss.1} parent=1 // pred_check
      %p131 = pneg %p60
    $region15: #{ex_loss.1} parent=1 // pred_check_branch
      %133 = sbr.rel (%p131) target = $region17
    $region16: #{ex_loss.1} parent=1 // pred_region
      %v134 = vld [vmem:[#allocation2] sm:$0xff]
      %135 = vadd.xlane.f32.xlu0 %v134
      %v136 = vpop.xlane.xlu0 %135
      %v137 = vrot.slane %v136, 4
      %v138 = vadd.f32 %v136, %v137
      %v139 = vrot.slane %v138, 2
      %v140 = vadd.f32 %v138, %v139
      %v141 = vrot.slane %v140, 1
      %v142 = vadd.f32 %v140, %v141
      %s143 = vtos %v142
      %s144 = scalar_lea.smem [#allocation5], 0
      %145 = sst [smem:[%s144]] %s143
      %v146 = vld [vmem:[#allocation3] sm:$0xff]
      %147 = vadd.xlane.f32.xlu0 %v146
      %v148 = vpop.xlane.xlu0 %147
      %v149 = vrot.slane %v148, 4
      %v150 = vadd.f32 %v148, %v149
      %v151 = vrot.slane %v150, 2
      %v152 = vadd.f32 %v150, %v151
      %v153 = vrot.slane %v152, 1
      %v154 = vadd.f32 %v152, %v153
      %s155 = vtos %v154
      %s156 = scalar_lea.smem [#allocation7], 0
      %157 = sst [smem:[%s156]] %s155
      %v158 = vld [vmem:[#allocation4] sm:$0xff]
      %159 = vadd.xlane.f32.xlu0 %v158
      %v160 = vpop.xlane.xlu0 %159
      %v161 = vrot.slane %v160, 4
      %v162 = vadd.f32 %v160, %v161
      %v163 = vrot.slane %v162, 2
      %v164 = vadd.f32 %v162, %v163
      %v165 = vrot.slane %v164, 1
      %v166 = vadd.f32 %v164, %v165
      %s167 = vtos %v166
      %s168 = scalar_lea.smem [#allocation9], 0
      %169 = sst [smem:[%s168]] %s167
    $region17: #{ex_loss.1} parent=1 // pred_fallthru
      _
    // Predicated region
    $region18: #{ex_loss.1} parent=1 // pred_check
      _
    $region19: #{ex_loss.1} parent=1 // pred_check_branch
      %171 = sbr.rel (0) target = $region21
    $region20: #{ex_loss.1} parent=1 // pred_region
      %s173 = ssub.s32 16, 16
      %174 = vsyncadd [#allocation6], %s173
      %177 = dma.smem_to_hbm [#allocation5], 16, %s2, [#allocation6]
    $region21: #{ex_loss.1} parent=1 // pred_fallthru
      _
    // Predicated region
    $region22: #{ex_loss.1} parent=1 // pred_check
      _
    $region23: #{ex_loss.1} parent=1 // pred_check_branch
      %179 = sbr.rel (0) target = $region25
    $region24: #{ex_loss.1} parent=1 // pred_region
      %s181 = ssub.s32 16, 16
      %182 = vsyncadd [#allocation8], %s181
      %185 = dma.smem_to_hbm [#allocation7], 16, %s3, [#allocation8]
    $region25: #{ex_loss.1} parent=1 // pred_fallthru
      _
    // Predicated region
    $region26: #{ex_loss.1} parent=1 // pred_check
      _
    $region27: #{ex_loss.1} parent=1 // pred_check_branch
      %187 = sbr.rel (0) target = $region29
    $region28: #{ex_loss.1} parent=1 // pred_region
      %s189 = ssub.s32 16, 16
      %190 = vsyncadd [#allocation8], %s189
      %193 = dma.smem_to_hbm [#allocation9], 16, %s4, [#allocation8]
    $region29: #{ex_loss.1} parent=1 // pred_fallthru
      _
    // Predicated region
    $region30: #{ex_loss.1} parent=1 // pred_check
      _
    $region31: #{ex_loss.1} parent=1 // pred_check_branch
      %195 = sbr.rel (0) target = $region33
    $region32: #{ex_loss.1} parent=1 // pred_region
      %196 = dma.done [#allocation6], 16
    $region33: #{ex_loss.1} parent=1 // pred_fallthru
      _
    // Predicated region
    $region34: #{ex_loss.1} parent=1 // pred_check
      _
    $region35: #{ex_loss.1} parent=1 // pred_check_branch
      %198 = sbr.rel (0) target = $region37
    $region36: #{ex_loss.1} parent=1 // pred_region
      %199 = dma.done [#allocation8], 16
    $region37: #{ex_loss.1} parent=1 // pred_fallthru
      _
    // Predicated region
    $region38: #{ex_loss.1} parent=1 // pred_check
      _
    $region39: #{ex_loss.1} parent=1 // pred_check_branch
      %201 = sbr.rel (0) target = $region41
    $region40: #{ex_loss.1} parent=1 // pred_region
      %202 = dma.done [#allocation8], 16
    $region41: #{ex_loss.1} parent=1 // pred_fallthru
      _
    %203 = sfence
    %204 = vsyncpa [#allocation6], 1
    %205 = vsyncpa [#allocation8], 1

</llo_original>
